<compile_context>
chip_gen: v7x
topology: tpu7x:2x2x1
jax: 0.10.0
libtpu: 0.0.40
codegen_flags: <defaults>
</compile_context>

<pallas_src>
import functools

import jax
import jax.numpy as jnp
from jax.experimental import pallas as pl
from jax.experimental.pallas import tpu as pltpu


# -----------------------------------------------------------------------------
# Fused kernel: one grid step = `bt` whole batch elements, all heads + MLP.
# -----------------------------------------------------------------------------
def gat_fused_kernel(x_ref, bias_ref, w_ref, apw_ref, w2b_ref, b1_ref, out_ref,
                     *, alpha, n_heads, n_hid):
    bt, n, nf = x_ref.shape

    # --- shared projections: one MXU matmul each, all batch elems + heads ---
    x2 = x_ref[...].reshape(bt * n, nf)                                 # (bt*n, F)
    wh = jnp.dot(x2, w_ref[...], preferred_element_type=jnp.float32)   # (bt*n, HH)

    apw = apw_ref[...]                                   # (HH, 2*heads+1)
    s = jnp.dot(wh, apw[:, :2 * n_heads],
                preferred_element_type=jnp.float32)      # (bt*n, 2*heads)
    w1 = apw[:, 2 * n_heads:]                            # (HH, 1)  lin1 weight

    s1 = s[:, :n_heads]                                  # query-side logits
    s2t = s[:, n_heads:].T                               # (heads, bt*n): ONE hoisted transpose
    bias_all = bias_ref[...]                             # (bt, n, n) additive adj mask
    b1 = b1_ref[0, 0]                                    # lin1 bias (SMEM scalar)

    cols = []
    for b in range(bt):                                  # static unroll (tiny)
        bias_b = bias_all[b]                             # (n, n)
        s_acc = jnp.zeros((n, 1), jnp.float32)
        for h in range(n_heads):                         # static unroll (tiny)
            e = s1[b * n:(b + 1) * n, h:h + 1] + s2t[h:h + 1, b * n:(b + 1) * n]
            e = jnp.where(e > 0, e, alpha * e) + bias_b  # LeakyReLU + hoisted mask
            m = jnp.max(e, axis=-1, keepdims=True)
            p = jnp.exp(e - m)
            att = p / jnp.sum(p, axis=-1, keepdims=True)             # exact softmax
            hv = jnp.dot(att, wh[b * n:(b + 1) * n, h * n_hid:(h + 1) * n_hid],
                         preferred_element_type=jnp.float32)         # (n, H)
            # ELU with clamped exp argument (no inf intermediates).
            hv = jnp.where(hv > 0, hv, jnp.exp(jnp.minimum(hv, 0.0)) - 1.0)
            # lin1 folded into the head loop: no lane-axis concat of heads.
            s_acc = s_acc + jnp.dot(hv, w1[h * n_hid:(h + 1) * n_hid, :],
                                    preferred_element_type=jnp.float32)
        cols.append(jnp.tanh(s_acc + b1))                # (n, 1)
    s_mat = jnp.concatenate(cols, axis=1).T              # (bt, n)

    # lin2 + sigmoid, lane-dense: w2 pre-transposed, b2 packed as the last row.
    w2b = w2b_ref[...]                                   # (n+1, C)
    y = (jnp.dot(s_mat, w2b[:n, :], preferred_element_type=jnp.float32)
         + w2b[n:n + 1, :])                              # (bt, C)
    out_ref[...] = jax.nn.sigmoid(y)                     # single contiguous store


# -----------------------------------------------------------------------------
# Full forward
# -----------------------------------------------------------------------------
def gat_forward(x, adj, params, alpha, *, batch_tile=None):
    B, N, F = x.shape
    n_heads, _, H = params["W"].shape
    HH = n_heads * H
    C = params["w2"].shape[0]

    # Default: whole batch in one grid step (kernel is fixed-overhead bound).
    # On v7x set batch_tile=B//2 so the two TensorCores each take half the batch.
    bt = B if batch_tile is None else batch_tile
    assert B % bt == 0
    steps = B // bt

    # ---- host-side (tiny) parameter packing, once per call ----
    # W_all[:, h*H:(h+1)*H] = W[h]
    w_all = jnp.transpose(params["W"], (1, 0, 2)).reshape(F, HH).astype(jnp.float32)
    # apw columns: [a1 per head (block-diag) | a2 per head (block-diag) | w1]
    a1 = jnp.zeros((HH, n_heads), jnp.float32)
    a2 = jnp.zeros((HH, n_heads), jnp.float32)
    for h in range(n_heads):
        a1 = a1.at[h * H:(h + 1) * H, h].set(params["A"][h, 0])
        a2 = a2.at[h * H:(h + 1) * H, h].set(params["A"][h, 1])
    apw = jnp.concatenate([a1, a2, params["w1"].astype(jnp.float32)], axis=1)
    # lin2 weight transposed (lane-dense) with its bias packed as the last row.
    w2b = jnp.concatenate([params["w2"].T, params["b2"].T], axis=0).astype(jnp.float32)
    # Additive adjacency bias (mask hoisted out of the kernel head loop).
    bias = jnp.where(adj > 0, 0.0, -9e15).astype(jnp.float32)
    b1 = params["b1"].reshape(1, 1).astype(jnp.float32)

    kernel = functools.partial(gat_fused_kernel, alpha=float(alpha),
                               n_heads=n_heads, n_hid=H)
    return pl.pallas_call(
        kernel,
        out_shape=jax.ShapeDtypeStruct((B, C), jnp.float32),
        grid_spec=pltpu.PrefetchScalarGridSpec(
            num_scalar_prefetch=0,
            grid=(steps,),
            in_specs=[
                pl.BlockSpec((bt, N, F), lambda g: (g, 0, 0)),          # x
                pl.BlockSpec((bt, N, N), lambda g: (g, 0, 0)),          # adj bias
                pl.BlockSpec((F, HH), lambda g: (0, 0)),                # packed W
                pl.BlockSpec((HH, 2 * n_heads + 1), lambda g: (0, 0)),  # [a1|a2|w1]
                pl.BlockSpec((N + 1, C), lambda g: (0, 0)),             # [w2^T; b2]
                pl.BlockSpec(memory_space=pltpu.MemorySpace.SMEM),      # b1 scalar
            ],
            out_specs=pl.BlockSpec((bt, C), lambda g: (g, 0)),
        ),
        compiler_params=pltpu.CompilerParams(
            dimension_semantics=("parallel",) if steps > 1 else ("arbitrary",)),
    )(x.astype(jnp.float32), bias, w_all, apw, w2b, b1)


def gat_reference(x, adj, params, alpha):
    """Pure-jnp reference (HIGHEST matmul precision to match the f32 kernel)."""
    prec = jax.lax.Precision.HIGHEST
    outs = []
    for h in range(params["W"].shape[0]):
        wh = jnp.einsum("bnf,fk->bnk", x, params["W"][h], precision=prec)
        e1 = jnp.einsum("bnk,k->bn", wh, params["A"][h, 0], precision=prec)[:, :, None]
        e2 = jnp.einsum("bnk,k->bn", wh, params["A"][h, 1], precision=prec)[:, None, :]
        e = e1 + e2
        e = jnp.where(e > 0, e, alpha * e)
        e = jnp.where(adj > 0, e, -9e15)
        att = jax.nn.softmax(e, axis=-1)
        hp = jnp.einsum("bij,bjk->bik", att, wh, precision=prec)
        outs.append(jnp.where(hp > 0, hp, jnp.exp(jnp.minimum(hp, 0.0)) - 1.0))
    feat = jnp.concatenate(outs, axis=2)
    s = jnp.squeeze(jnp.tanh(
        jnp.einsum("bnk,ko->bno", feat, params["w1"], precision=prec)
        + params["b1"][0]), axis=-1)
    y = jnp.einsum("bn,cn->bc", s, params["w2"], precision=prec) + params["b2"][:, 0]
    return jax.nn.sigmoid(y)


if __name__ == "__main__":
    # small, module-consistent shapes
    B, n_path, n_feat, n_hid, n_class, n_heads = 2, 8, 16, 32, 4, 2
    alpha = 0.2

    key = jax.random.PRNGKey(0)
    kx, kadj, kw, ka, k1, k2, k3, k4 = jax.random.split(key, 8)

    x = jax.random.normal(kx, (B, n_path, n_feat), dtype=jnp.float32)
    adj = (jax.random.uniform(kadj, (B, n_path, n_path)) > 0.5).astype(jnp.float32)
    adj = jnp.maximum(adj, jnp.eye(n_path, dtype=jnp.float32)[None])  # self loops

    params = {
        "W": 0.2 * jax.random.normal(kw, (n_heads, n_feat, n_hid), dtype=jnp.float32),
        "A": 0.2 * jax.random.normal(ka, (n_heads, 2, n_hid), dtype=jnp.float32),
        "w1": 0.2 * jax.random.normal(k1, (n_heads * n_hid, 1), dtype=jnp.float32),
        "b1": 0.1 * jax.random.normal(k2, (1, 1), dtype=jnp.float32),
        "w2": 0.2 * jax.random.normal(k3, (n_class, n_path), dtype=jnp.float32),
        "b2": 0.1 * jax.random.normal(k4, (n_class, 1), dtype=jnp.float32),
    }

    out = jax.block_until_ready(gat_forward(x, adj, params, alpha))
    ref = jax.block_until_ready(gat_reference(x, adj, params, alpha))
    assert out.shape == (B, n_class), out.shape
    assert jnp.allclose(out, ref, atol=1e-3, rtol=1e-3), (out, ref)
    print("KERNEL_OK")
</pallas_src>

<mosaic_0001>
module attributes {stable_mosaic.version = 11 : i64} {
  func.func @gat_fused_kernel(%arg0: i32, %arg1: memref<2x8x16xf32, #tpu.memory_space<vmem>>, %arg2: memref<2x8x8xf32, #tpu.memory_space<vmem>>, %arg3: memref<16x64xf32, #tpu.memory_space<vmem>>, %arg4: memref<64x5xf32, #tpu.memory_space<vmem>>, %arg5: memref<9x4xf32, #tpu.memory_space<vmem>>, %arg6: memref<1x1xf32, #tpu.memory_space<smem>>, %arg7: memref<2x4xf32, #tpu.memory_space<vmem>>) attributes {dimension_semantics = [#tpu.dimension_semantics<arbitrary>], iteration_bounds = array<i64: 1>, scalar_prefetch = 0 : i64, scratch_operands = 0 : i64, tpu.core_type = #tpu.core_type<tc>, window_params = [{transform_indices = @transform_0, window_bounds = array<i64: 2, 8, 16>}, {transform_indices = @transform_1, window_bounds = array<i64: 2, 8, 8>}, {pipeline_mode = #tpu.pipeline_mode<synchronous>, transform_indices = @transform_2, window_bounds = array<i64: 16, 64>}, {pipeline_mode = #tpu.pipeline_mode<synchronous>, transform_indices = @transform_3, window_bounds = array<i64: 64, 5>}, {pipeline_mode = #tpu.pipeline_mode<synchronous>, transform_indices = @transform_4, window_bounds = array<i64: 9, 4>}, {transform_indices = @transform_5, window_bounds = array<i64: 1, 1>}, {transform_indices = @transform_6, window_bounds = array<i64: 2, 4>}]} {
    %c0 = arith.constant 0 : index
    %c0_0 = arith.constant 0 : index
    %c0_1 = arith.constant 0 : index
    %0 = vector.load %arg1[%c0, %c0_0, %c0_1] : memref<2x8x16xf32, #tpu.memory_space<vmem>>, vector<2x8x16xf32>
    %1 = vector.shape_cast %0 : vector<2x8x16xf32> to vector<16x16xf32>
    %c0_2 = arith.constant 0 : index
    %c0_3 = arith.constant 0 : index
    %2 = vector.load %arg3[%c0_2, %c0_3] : memref<16x64xf32, #tpu.memory_space<vmem>>, vector<16x64xf32>
    %cst = arith.constant dense<0.000000e+00> : vector<16x64xf32>
    %3 = tpu.matmul %1, %2, %cst {dimension_numbers = #tpu.dot_dimension_numbers<[1], [0], [0], [1], [0, 0, 1, 1], [], []>} : vector<16x16xf32>, vector<16x64xf32>, vector<16x64xf32> -> vector<16x64xf32>
    %c0_4 = arith.constant 0 : index
    %c0_5 = arith.constant 0 : index
    %4 = vector.load %arg4[%c0_4, %c0_5] : memref<64x5xf32, #tpu.memory_space<vmem>>, vector<64x5xf32>
    %5 = vector.extract_strided_slice %4 {offsets = [0, 0], sizes = [64, 4], strides = [1, 1]} : vector<64x5xf32> to vector<64x4xf32>
    %cst_6 = arith.constant dense<0.000000e+00> : vector<16x4xf32>
    %6 = tpu.matmul %3, %5, %cst_6 {dimension_numbers = #tpu.dot_dimension_numbers<[1], [0], [0], [1], [0, 0, 1, 1], [], []>} : vector<16x64xf32>, vector<64x4xf32>, vector<16x4xf32> -> vector<16x4xf32>
    %7 = vector.extract_strided_slice %4 {offsets = [0, 4], sizes = [64, 1], strides = [1, 1]} : vector<64x5xf32> to vector<64x1xf32>
    %8 = vector.extract_strided_slice %6 {offsets = [0, 0], sizes = [16, 2], strides = [1, 1]} : vector<16x4xf32> to vector<16x2xf32>
    %9 = vector.extract_strided_slice %6 {offsets = [0, 2], sizes = [16, 2], strides = [1, 1]} : vector<16x4xf32> to vector<16x2xf32>
    %10 = tpu.transpose %9, [1, 0] : vector<16x2xf32> -> vector<2x16xf32>
    %c0_7 = arith.constant 0 : index
    %c0_8 = arith.constant 0 : index
    %c0_9 = arith.constant 0 : index
    %11 = vector.load %arg2[%c0_7, %c0_8, %c0_9] : memref<2x8x8xf32, #tpu.memory_space<vmem>>, vector<2x8x8xf32>
    %c0_10 = arith.constant 0 : index
    %c0_11 = arith.constant 0 : index
    %12 = memref.load %arg6[%c0_10, %c0_11] : memref<1x1xf32, #tpu.memory_space<smem>>
    %13 = vector.extract_strided_slice %11 {offsets = [0, 0, 0], sizes = [1, 8, 8], strides = [1, 1, 1]} : vector<2x8x8xf32> to vector<1x8x8xf32>
    %14 = vector.shape_cast %13 : vector<1x8x8xf32> to vector<8x8xf32>
    %cst_12 = arith.constant 0.000000e+00 : f32
    %15 = vector.broadcast %cst_12 : f32 to vector<8x1xf32>
    %16 = vector.extract_strided_slice %8 {offsets = [0, 0], sizes = [8, 1], strides = [1, 1]} : vector<16x2xf32> to vector<8x1xf32>
    %17 = vector.extract_strided_slice %10 {offsets = [0, 0], sizes = [1, 8], strides = [1, 1]} : vector<2x16xf32> to vector<1x8xf32>
    %18 = vector.broadcast %16 : vector<8x1xf32> to vector<8x8xf32>
    %19 = vector.broadcast %17 : vector<1x8xf32> to vector<8x8xf32>
    %20 = arith.addf %18, %19 : vector<8x8xf32>
    %cst_13 = arith.constant 0.000000e+00 : f32
    %21 = vector.broadcast %cst_13 : f32 to vector<8x8xf32>
    %22 = arith.cmpf ogt, %20, %21 : vector<8x8xf32>
    %cst_14 = arith.constant 2.000000e-01 : f32
    %23 = vector.broadcast %cst_14 : f32 to vector<8x8xf32>
    %24 = arith.mulf %23, %20 : vector<8x8xf32>
    %25 = arith.select %22, %20, %24 : vector<8x8xi1>, vector<8x8xf32>
    %26 = arith.addf %25, %14 : vector<8x8xf32>
    %cst_15 = arith.constant dense<0xFF800000> : vector<8xf32>
    %27 = vector.multi_reduction <maximumf>, %26, %cst_15 [1] : vector<8x8xf32> to vector<8xf32>
    %28 = vector.shape_cast %27 : vector<8xf32> to vector<8x1xf32>
    %29 = vector.broadcast %28 : vector<8x1xf32> to vector<8x8xf32>
    %30 = arith.subf %26, %29 : vector<8x8xf32>
    %31 = math.exp %30 : vector<8x8xf32>
    %cst_16 = arith.constant dense<0.000000e+00> : vector<8xf32>
    %32 = vector.multi_reduction <add>, %31, %cst_16 [1] : vector<8x8xf32> to vector<8xf32>
    %33 = vector.shape_cast %32 : vector<8xf32> to vector<8x1xf32>
    %34 = vector.broadcast %33 : vector<8x1xf32> to vector<8x8xf32>
    %35 = arith.divf %31, %34 : vector<8x8xf32>
    %36 = vector.extract_strided_slice %3 {offsets = [0, 0], sizes = [8, 32], strides = [1, 1]} : vector<16x64xf32> to vector<8x32xf32>
    %cst_17 = arith.constant dense<0.000000e+00> : vector<8x32xf32>
    %37 = tpu.matmul %35, %36, %cst_17 {dimension_numbers = #tpu.dot_dimension_numbers<[1], [0], [0], [1], [0, 0, 1, 1], [], []>} : vector<8x8xf32>, vector<8x32xf32>, vector<8x32xf32> -> vector<8x32xf32>
    %cst_18 = arith.constant 0.000000e+00 : f32
    %38 = vector.broadcast %cst_18 : f32 to vector<8x32xf32>
    %39 = arith.cmpf ogt, %37, %38 : vector<8x32xf32>
    %cst_19 = arith.constant 0.000000e+00 : f32
    %40 = vector.broadcast %cst_19 : f32 to vector<8x32xf32>
    %41 = arith.minimumf %37, %40 : vector<8x32xf32>
    %42 = math.exp %41 : vector<8x32xf32>
    %cst_20 = arith.constant 1.000000e+00 : f32
    %43 = vector.broadcast %cst_20 : f32 to vector<8x32xf32>
    %44 = arith.subf %42, %43 : vector<8x32xf32>
    %45 = arith.select %39, %37, %44 : vector<8x32xi1>, vector<8x32xf32>
    %46 = vector.extract_strided_slice %7 {offsets = [0, 0], sizes = [32, 1], strides = [1, 1]} : vector<64x1xf32> to vector<32x1xf32>
    %cst_21 = arith.constant dense<0.000000e+00> : vector<8x1xf32>
    %47 = tpu.matmul %45, %46, %cst_21 {dimension_numbers = #tpu.dot_dimension_numbers<[1], [0], [0], [1], [0, 0, 1, 1], [], []>} : vector<8x32xf32>, vector<32x1xf32>, vector<8x1xf32> -> vector<8x1xf32>
    %48 = arith.addf %15, %47 : vector<8x1xf32>
    %49 = vector.extract_strided_slice %8 {offsets = [0, 1], sizes = [8, 1], strides = [1, 1]} : vector<16x2xf32> to vector<8x1xf32>
    %50 = vector.extract_strided_slice %10 {offsets = [1, 0], sizes = [1, 8], strides = [1, 1]} : vector<2x16xf32> to vector<1x8xf32>
    %51 = vector.broadcast %49 : vector<8x1xf32> to vector<8x8xf32>
    %52 = vector.broadcast %50 : vector<1x8xf32> to vector<8x8xf32>
    %53 = arith.addf %51, %52 : vector<8x8xf32>
    %cst_22 = arith.constant 0.000000e+00 : f32
    %54 = vector.broadcast %cst_22 : f32 to vector<8x8xf32>
    %55 = arith.cmpf ogt, %53, %54 : vector<8x8xf32>
    %cst_23 = arith.constant 2.000000e-01 : f32
    %56 = vector.broadcast %cst_23 : f32 to vector<8x8xf32>
    %57 = arith.mulf %56, %53 : vector<8x8xf32>
    %58 = arith.select %55, %53, %57 : vector<8x8xi1>, vector<8x8xf32>
    %59 = arith.addf %58, %14 : vector<8x8xf32>
    %cst_24 = arith.constant dense<0xFF800000> : vector<8xf32>
    %60 = vector.multi_reduction <maximumf>, %59, %cst_24 [1] : vector<8x8xf32> to vector<8xf32>
    %61 = vector.shape_cast %60 : vector<8xf32> to vector<8x1xf32>
    %62 = vector.broadcast %61 : vector<8x1xf32> to vector<8x8xf32>
    %63 = arith.subf %59, %62 : vector<8x8xf32>
    %64 = math.exp %63 : vector<8x8xf32>
    %cst_25 = arith.constant dense<0.000000e+00> : vector<8xf32>
    %65 = vector.multi_reduction <add>, %64, %cst_25 [1] : vector<8x8xf32> to vector<8xf32>
    %66 = vector.shape_cast %65 : vector<8xf32> to vector<8x1xf32>
    %67 = vector.broadcast %66 : vector<8x1xf32> to vector<8x8xf32>
    %68 = arith.divf %64, %67 : vector<8x8xf32>
    %69 = vector.extract_strided_slice %3 {offsets = [0, 32], sizes = [8, 32], strides = [1, 1]} : vector<16x64xf32> to vector<8x32xf32>
    %cst_26 = arith.constant dense<0.000000e+00> : vector<8x32xf32>
    %70 = tpu.matmul %68, %69, %cst_26 {dimension_numbers = #tpu.dot_dimension_numbers<[1], [0], [0], [1], [0, 0, 1, 1], [], []>} : vector<8x8xf32>, vector<8x32xf32>, vector<8x32xf32> -> vector<8x32xf32>
    %cst_27 = arith.constant 0.000000e+00 : f32
    %71 = vector.broadcast %cst_27 : f32 to vector<8x32xf32>
    %72 = arith.cmpf ogt, %70, %71 : vector<8x32xf32>
    %cst_28 = arith.constant 0.000000e+00 : f32
    %73 = vector.broadcast %cst_28 : f32 to vector<8x32xf32>
    %74 = arith.minimumf %70, %73 : vector<8x32xf32>
    %75 = math.exp %74 : vector<8x32xf32>
    %cst_29 = arith.constant 1.000000e+00 : f32
    %76 = vector.broadcast %cst_29 : f32 to vector<8x32xf32>
    %77 = arith.subf %75, %76 : vector<8x32xf32>
    %78 = arith.select %72, %70, %77 : vector<8x32xi1>, vector<8x32xf32>
    %79 = vector.extract_strided_slice %7 {offsets = [32, 0], sizes = [32, 1], strides = [1, 1]} : vector<64x1xf32> to vector<32x1xf32>
    %cst_30 = arith.constant dense<0.000000e+00> : vector<8x1xf32>
    %80 = tpu.matmul %78, %79, %cst_30 {dimension_numbers = #tpu.dot_dimension_numbers<[1], [0], [0], [1], [0, 0, 1, 1], [], []>} : vector<8x32xf32>, vector<32x1xf32>, vector<8x1xf32> -> vector<8x1xf32>
    %81 = arith.addf %48, %80 : vector<8x1xf32>
    %82 = vector.broadcast %12 : f32 to vector<8x1xf32>
    %83 = arith.addf %81, %82 : vector<8x1xf32>
    %84 = math.tanh %83 : vector<8x1xf32>
    %85 = vector.extract_strided_slice %11 {offsets = [1, 0, 0], sizes = [1, 8, 8], strides = [1, 1, 1]} : vector<2x8x8xf32> to vector<1x8x8xf32>
    %86 = vector.shape_cast %85 : vector<1x8x8xf32> to vector<8x8xf32>
    %cst_31 = arith.constant 0.000000e+00 : f32
    %87 = vector.broadcast %cst_31 : f32 to vector<8x1xf32>
    %88 = vector.extract_strided_slice %8 {offsets = [8, 0], sizes = [8, 1], strides = [1, 1]} : vector<16x2xf32> to vector<8x1xf32>
    %89 = vector.extract_strided_slice %10 {offsets = [0, 8], sizes = [1, 8], strides = [1, 1]} : vector<2x16xf32> to vector<1x8xf32>
    %90 = vector.broadcast %88 : vector<8x1xf32> to vector<8x8xf32>
    %91 = vector.broadcast %89 : vector<1x8xf32> to vector<8x8xf32>
    %92 = arith.addf %90, %91 : vector<8x8xf32>
    %cst_32 = arith.constant 0.000000e+00 : f32
    %93 = vector.broadcast %cst_32 : f32 to vector<8x8xf32>
    %94 = arith.cmpf ogt, %92, %93 : vector<8x8xf32>
    %cst_33 = arith.constant 2.000000e-01 : f32
    %95 = vector.broadcast %cst_33 : f32 to vector<8x8xf32>
    %96 = arith.mulf %95, %92 : vector<8x8xf32>
    %97 = arith.select %94, %92, %96 : vector<8x8xi1>, vector<8x8xf32>
    %98 = arith.addf %97, %86 : vector<8x8xf32>
    %cst_34 = arith.constant dense<0xFF800000> : vector<8xf32>
    %99 = vector.multi_reduction <maximumf>, %98, %cst_34 [1] : vector<8x8xf32> to vector<8xf32>
    %100 = vector.shape_cast %99 : vector<8xf32> to vector<8x1xf32>
    %101 = vector.broadcast %100 : vector<8x1xf32> to vector<8x8xf32>
    %102 = arith.subf %98, %101 : vector<8x8xf32>
    %103 = math.exp %102 : vector<8x8xf32>
    %cst_35 = arith.constant dense<0.000000e+00> : vector<8xf32>
    %104 = vector.multi_reduction <add>, %103, %cst_35 [1] : vector<8x8xf32> to vector<8xf32>
    %105 = vector.shape_cast %104 : vector<8xf32> to vector<8x1xf32>
    %106 = vector.broadcast %105 : vector<8x1xf32> to vector<8x8xf32>
    %107 = arith.divf %103, %106 : vector<8x8xf32>
    %108 = vector.extract_strided_slice %3 {offsets = [8, 0], sizes = [8, 32], strides = [1, 1]} : vector<16x64xf32> to vector<8x32xf32>
    %cst_36 = arith.constant dense<0.000000e+00> : vector<8x32xf32>
    %109 = tpu.matmul %107, %108, %cst_36 {dimension_numbers = #tpu.dot_dimension_numbers<[1], [0], [0], [1], [0, 0, 1, 1], [], []>} : vector<8x8xf32>, vector<8x32xf32>, vector<8x32xf32> -> vector<8x32xf32>
    %cst_37 = arith.constant 0.000000e+00 : f32
    %110 = vector.broadcast %cst_37 : f32 to vector<8x32xf32>
    %111 = arith.cmpf ogt, %109, %110 : vector<8x32xf32>
    %cst_38 = arith.constant 0.000000e+00 : f32
    %112 = vector.broadcast %cst_38 : f32 to vector<8x32xf32>
    %113 = arith.minimumf %109, %112 : vector<8x32xf32>
    %114 = math.exp %113 : vector<8x32xf32>
    %cst_39 = arith.constant 1.000000e+00 : f32
    %115 = vector.broadcast %cst_39 : f32 to vector<8x32xf32>
    %116 = arith.subf %114, %115 : vector<8x32xf32>
    %117 = arith.select %111, %109, %116 : vector<8x32xi1>, vector<8x32xf32>
    %118 = vector.extract_strided_slice %7 {offsets = [0, 0], sizes = [32, 1], strides = [1, 1]} : vector<64x1xf32> to vector<32x1xf32>
    %cst_40 = arith.constant dense<0.000000e+00> : vector<8x1xf32>
    %119 = tpu.matmul %117, %118, %cst_40 {dimension_numbers = #tpu.dot_dimension_numbers<[1], [0], [0], [1], [0, 0, 1, 1], [], []>} : vector<8x32xf32>, vector<32x1xf32>, vector<8x1xf32> -> vector<8x1xf32>
    %120 = arith.addf %87, %119 : vector<8x1xf32>
    %121 = vector.extract_strided_slice %8 {offsets = [8, 1], sizes = [8, 1], strides = [1, 1]} : vector<16x2xf32> to vector<8x1xf32>
    %122 = vector.extract_strided_slice %10 {offsets = [1, 8], sizes = [1, 8], strides = [1, 1]} : vector<2x16xf32> to vector<1x8xf32>
    %123 = vector.broadcast %121 : vector<8x1xf32> to vector<8x8xf32>
    %124 = vector.broadcast %122 : vector<1x8xf32> to vector<8x8xf32>
    %125 = arith.addf %123, %124 : vector<8x8xf32>
    %cst_41 = arith.constant 0.000000e+00 : f32
    %126 = vector.broadcast %cst_41 : f32 to vector<8x8xf32>
    %127 = arith.cmpf ogt, %125, %126 : vector<8x8xf32>
    %cst_42 = arith.constant 2.000000e-01 : f32
    %128 = vector.broadcast %cst_42 : f32 to vector<8x8xf32>
    %129 = arith.mulf %128, %125 : vector<8x8xf32>
    %130 = arith.select %127, %125, %129 : vector<8x8xi1>, vector<8x8xf32>
    %131 = arith.addf %130, %86 : vector<8x8xf32>
    %cst_43 = arith.constant dense<0xFF800000> : vector<8xf32>
    %132 = vector.multi_reduction <maximumf>, %131, %cst_43 [1] : vector<8x8xf32> to vector<8xf32>
    %133 = vector.shape_cast %132 : vector<8xf32> to vector<8x1xf32>
    %134 = vector.broadcast %133 : vector<8x1xf32> to vector<8x8xf32>
    %135 = arith.subf %131, %134 : vector<8x8xf32>
    %136 = math.exp %135 : vector<8x8xf32>
    %cst_44 = arith.constant dense<0.000000e+00> : vector<8xf32>
    %137 = vector.multi_reduction <add>, %136, %cst_44 [1] : vector<8x8xf32> to vector<8xf32>
    %138 = vector.shape_cast %137 : vector<8xf32> to vector<8x1xf32>
    %139 = vector.broadcast %138 : vector<8x1xf32> to vector<8x8xf32>
    %140 = arith.divf %136, %139 : vector<8x8xf32>
    %141 = vector.extract_strided_slice %3 {offsets = [8, 32], sizes = [8, 32], strides = [1, 1]} : vector<16x64xf32> to vector<8x32xf32>
    %cst_45 = arith.constant dense<0.000000e+00> : vector<8x32xf32>
    %142 = tpu.matmul %140, %141, %cst_45 {dimension_numbers = #tpu.dot_dimension_numbers<[1], [0], [0], [1], [0, 0, 1, 1], [], []>} : vector<8x8xf32>, vector<8x32xf32>, vector<8x32xf32> -> vector<8x32xf32>
    %cst_46 = arith.constant 0.000000e+00 : f32
    %143 = vector.broadcast %cst_46 : f32 to vector<8x32xf32>
    %144 = arith.cmpf ogt, %142, %143 : vector<8x32xf32>
    %cst_47 = arith.constant 0.000000e+00 : f32
    %145 = vector.broadcast %cst_47 : f32 to vector<8x32xf32>
    %146 = arith.minimumf %142, %145 : vector<8x32xf32>
    %147 = math.exp %146 : vector<8x32xf32>
    %cst_48 = arith.constant 1.000000e+00 : f32
    %148 = vector.broadcast %cst_48 : f32 to vector<8x32xf32>
    %149 = arith.subf %147, %148 : vector<8x32xf32>
    %150 = arith.select %144, %142, %149 : vector<8x32xi1>, vector<8x32xf32>
    %151 = vector.extract_strided_slice %7 {offsets = [32, 0], sizes = [32, 1], strides = [1, 1]} : vector<64x1xf32> to vector<32x1xf32>
    %cst_49 = arith.constant dense<0.000000e+00> : vector<8x1xf32>
    %152 = tpu.matmul %150, %151, %cst_49 {dimension_numbers = #tpu.dot_dimension_numbers<[1], [0], [0], [1], [0, 0, 1, 1], [], []>} : vector<8x32xf32>, vector<32x1xf32>, vector<8x1xf32> -> vector<8x1xf32>
    %153 = arith.addf %120, %152 : vector<8x1xf32>
    %154 = vector.broadcast %12 : f32 to vector<8x1xf32>
    %155 = arith.addf %153, %154 : vector<8x1xf32>
    %156 = math.tanh %155 : vector<8x1xf32>
    %157 = tpu.concatenate %84, %156 in 1 : vector<8x1xf32>, vector<8x1xf32> -> vector<8x2xf32>
    %158 = tpu.transpose %157, [1, 0] : vector<8x2xf32> -> vector<2x8xf32>
    %c0_50 = arith.constant 0 : index
    %c0_51 = arith.constant 0 : index
    %159 = vector.load %arg5[%c0_50, %c0_51] : memref<9x4xf32, #tpu.memory_space<vmem>>, vector<9x4xf32>
    %160 = vector.extract_strided_slice %159 {offsets = [0, 0], sizes = [8, 4], strides = [1, 1]} : vector<9x4xf32> to vector<8x4xf32>
    %cst_52 = arith.constant dense<0.000000e+00> : vector<2x4xf32>
    %161 = tpu.matmul %158, %160, %cst_52 {dimension_numbers = #tpu.dot_dimension_numbers<[1], [0], [0], [1], [0, 0, 1, 1], [], []>} : vector<2x8xf32>, vector<8x4xf32>, vector<2x4xf32> -> vector<2x4xf32>
    %162 = vector.extract_strided_slice %159 {offsets = [8, 0], sizes = [1, 4], strides = [1, 1]} : vector<9x4xf32> to vector<1x4xf32>
    %163 = vector.broadcast %162 : vector<1x4xf32> to vector<2x4xf32>
    %164 = arith.addf %161, %163 : vector<2x4xf32>
    %165 = arith.negf %164 : vector<2x4xf32>
    %166 = math.exp %165 : vector<2x4xf32>
    %cst_53 = arith.constant 1.000000e+00 : f32
    %167 = vector.broadcast %cst_53 : f32 to vector<2x4xf32>
    %168 = arith.addf %167, %166 : vector<2x4xf32>
    %169 = arith.divf %167, %168 : vector<2x4xf32>
    %c0_54 = arith.constant 0 : index
    %c0_55 = arith.constant 0 : index
    %170 = vector.load %arg7[%c0_54, %c0_55] : memref<2x4xf32, #tpu.memory_space<vmem>>, vector<2x4xf32>
    tpu.vector_store %arg7[%c0_54, %c0_55], %169 {strides = array<i32>} : memref<2x4xf32, #tpu.memory_space<vmem>>, vector<2x4xf32>,
    return
  }
  func.func @transform_0(%arg0: i32) -> (i32, i32, i32) {
    %c0_i32 = arith.constant 0 : i32
    %c0_i32_0 = arith.constant 0 : i32
    %c0_i32_1 = arith.constant 0 : i32
    return %arg0, %c0_i32, %c0_i32_0 : i32, i32, i32
  }
  func.func @transform_1(%arg0: i32) -> (i32, i32, i32) {
    %c0_i32 = arith.constant 0 : i32
    %c0_i32_0 = arith.constant 0 : i32
    %c0_i32_1 = arith.constant 0 : i32
    return %arg0, %c0_i32, %c0_i32_0 : i32, i32, i32
  }
  func.func @transform_2(%arg0: i32) -> (i32, i32) {
    %c0_i32 = arith.constant 0 : i32
    %c0_i32_0 = arith.constant 0 : i32
    %c0_i32_1 = arith.constant 0 : i32
    return %c0_i32, %c0_i32_0 : i32, i32
  }
  func.func @transform_3(%arg0: i32) -> (i32, i32) {
    %c0_i32 = arith.constant 0 : i32
    %c0_i32_0 = arith.constant 0 : i32
    %c0_i32_1 = arith.constant 0 : i32
    return %c0_i32, %c0_i32_0 : i32, i32
  }
  func.func @transform_4(%arg0: i32) -> (i32, i32) {
    %c0_i32 = arith.constant 0 : i32
    %c0_i32_0 = arith.constant 0 : i32
    %c0_i32_1 = arith.constant 0 : i32
    return %c0_i32, %c0_i32_0 : i32, i32
  }
  func.func @transform_5(%arg0: i32) -> (i32, i32) {
    %c0_i32 = arith.constant 0 : i32
    %c0_i32_0 = arith.constant 0 : i32
    %c0_i32_1 = arith.constant 0 : i32
    return %c0_i32, %c0_i32_0 : i32, i32
  }
  func.func @transform_6(%arg0: i32) -> (i32, i32) {
    %c0_i32 = arith.constant 0 : i32
    %c0_i32_0 = arith.constant 0 : i32
    return %arg0, %c0_i32 : i32, i32
  }
}

</mosaic_0001>

<llo_original>
// kernel: tpu_custom_call.1
$region0: #{tpu_custom_call.1}
  #allocation0 [shape = 'u32[]', space=smem, size = 0x4, offset = 0x4, fixed_abs, tag = 'smem constant byte address 0x4 - core index']
  #allocation1 [shape = 'u32[144,128]{1,0:T(1,128)}', space=vmem, size = 0x12000, scoped, tag = 'internal scratch']
  #allocation2 [shape = 'f32[1,1]{1,0:T(1,128)S(6)}', space=smem, size = 0x200, scoped, tag = 'scoped memory for tpu_custom_call.1']
  %s0 = inlined_call_operand.vmem [shape: f32[2,8,16], index: 0, kind: input, shape index: {}]
  %s1 = inlined_call_operand.vmem [shape: f32[2,8,8], index: 1, kind: input, shape index: {}]
  %s2 = inlined_call_operand.vmem [shape: f32[16,64], index: 2, kind: input, shape index: {}]
  %s3 = inlined_call_operand.vmem [shape: f32[64,5], index: 3, kind: input, shape index: {}]
  %s4 = inlined_call_operand.vmem [shape: f32[9,4], index: 4, kind: input, shape index: {}]
  %s5 = inlined_call_operand.<no memory space> [shape: f32[1,1], index: 5, kind: input, shape index: {}]
  %s6 = inlined_call_operand.hbm [shape: f32[2,4], index: 6, kind: output, shape index: {}]
  %s7 = sld [smem:[#allocation0]]
  $region34: #{tpu_custom_call.1} parent=0
    _
  %s9 = ssub.s32 1, %s7
  %s10 = scalar_select 0, %s9, %s7
  %11 = sst [smem:[#allocation2]] %s5
  $region1: #{tpu_custom_call.1} parent=0
    #allocation3 [shape = 'u8[1024]{0}', space=vmem, size = 0x400, scoped, tag = 'output window, operand 0, single buffered']
    #allocation4 [shape = 's32[1]{0}', space=sflag, size = 0x4, scoped, tag = 'scoped memory for tpu_custom_call.1']
    %12 = vsyncpa [#allocation4], 0
    // Predicated region
    $region2: #{tpu_custom_call.1} parent=1 // pred_check
      _
    $region3: #{tpu_custom_call.1} parent=1 // pred_check_branch
      %14 = sbr.rel (0) target = $region5
    $region4: #{tpu_custom_call.1} parent=1 // pred_region
      _
    $region5: #{tpu_custom_call.1} parent=1 // pred_fallthru
      _
    // Predicated region
    $region6: #{tpu_custom_call.1} parent=1 // pred_check
      _
    $region7: #{tpu_custom_call.1} parent=1 // pred_check_branch
      %16 = sbr.rel (0) target = $region9
    $region8: #{tpu_custom_call.1} parent=1 // pred_region
      _
    $region9: #{tpu_custom_call.1} parent=1 // pred_fallthru
      _
    // Predicated region
    $region10: #{tpu_custom_call.1} parent=1 // pred_check
      _
    $region11: #{tpu_custom_call.1} parent=1 // pred_check_branch
      %18 = sbr.rel (0) target = $region13
    $region12: #{tpu_custom_call.1} parent=1 // pred_region
      _
    $region13: #{tpu_custom_call.1} parent=1 // pred_fallthru
      _
    // Predicated region
    $region14: #{tpu_custom_call.1} parent=1 // pred_check
      _
    $region15: #{tpu_custom_call.1} parent=1 // pred_check_branch
      %20 = sbr.rel (0) target = $region17
    $region16: #{tpu_custom_call.1} parent=1 // pred_region
      _
    $region17: #{tpu_custom_call.1} parent=1 // pred_fallthru
      _
    // Predicated region
    $region18: #{tpu_custom_call.1} parent=1 // pred_check
      _
    $region19: #{tpu_custom_call.1} parent=1 // pred_check_branch
      %22 = sbr.rel (0) target = $region21
    $region20: #{tpu_custom_call.1} parent=1 // pred_region
      _
    $region21: #{tpu_custom_call.1} parent=1 // pred_fallthru
      _
    // Predicated region
    $region22: #{tpu_custom_call.1} parent=1 // pred_check
      _
    $region23: #{tpu_custom_call.1} parent=1 // pred_check_branch
      %24 = sbr.rel (0) target = $region25
    $region24: #{tpu_custom_call.1} parent=1 // pred_region
      _
    $region25: #{tpu_custom_call.1} parent=1 // pred_fallthru
      _
    %v25 = vld [vmem:[%s0] sm:$0xff]
    %v26 = vld [vmem:[%s0 + $0x8] sm:$0xff]
    %v27 = vld [vmem:[%s2] sm:$0xff]
    %v28 = vld [vmem:[%s2 + $0x8] sm:$0xff]
    %vm29 = vcmask 130048
    %v31 = vsel %vm29, %v25, 0
    %v34 = vsel %vm29, %v26, 0
    %36 = vmatprep.subr.mxu0 0.0
    %37 = vmatpush1.msra.mxu0 %v27
    %38 = vmatprep.subr.mxu0 0.0
    %39 = vmatpush1.msra.mxu0 %v28
    %40 = vmatprep.subr.mxu0 0.0
    %41 = vmatpush1.msra.mxu0 0.0
    %42 = vmatprep.subr.mxu0 0.0
    %43 = vmatpush1.msra.mxu0 0.0
    %44 = vmatprep.subr.mxu0 0.0
    %45 = vmatpush1.msra.mxu0 0.0
    %46 = vmatprep.subr.mxu0 0.0
    %47 = vmatpush1.msra.mxu0 0.0
    %48 = vmatprep.subr.mxu0 0.0
    %49 = vmatpush1.msra.mxu0 0.0
    %50 = vmatprep.subr.mxu0 0.0
    %51 = vmatpush1.msra.mxu0 0.0
    %52 = vmatprep.subr.mxu0 0.0
    %53 = vmatpush1.msra.mxu0 0.0
    %54 = vmatprep.subr.mxu0 0.0
    %55 = vmatpush1.msra.mxu0 0.0
    %56 = vmatprep.subr.mxu0 0.0
    %57 = vmatpush1.msra.mxu0 0.0
    %58 = vmatprep.subr.mxu0 0.0
    %59 = vmatpush1.msra.mxu0 0.0
    %60 = vmatprep.subr.mxu0 0.0
    %61 = vmatpush1.msra.mxu0 0.0
    %62 = vmatprep.subr.mxu0 0.0
    %63 = vmatpush1.msra.mxu0 0.0
    %64 = vmatprep.subr.mxu0 0.0
    %65 = vmatpush1.msra.mxu0 0.0
    %66 = vmatprep.subr.mxu0 0.0
    %67 = vmatpush1.msra.mxu0 0.0
    %68 = vmatprep.subr.mxu0 0.0
    %69 = vmatpush1.msra.mxu0 0.0
    %70 = vmatprep.subr.mxu0 0.0
    %71 = vmatpush1.msra.mxu0 0.0
    %72 = vmatprep.subr.mxu0 0.0
    %73 = vmatpush1.msra.mxu0 0.0
    %74 = vmatprep.subr.mxu0 0.0
    %75 = vmatpush1.msra.mxu0 0.0
    %76 = vmatprep.subr.mxu0 0.0
    %77 = vmatpush1.msra.mxu0 0.0
    %78 = vmatprep.subr.mxu0 0.0
    %79 = vmatpush1.msra.mxu0 0.0
    %80 = vmatprep.subr.mxu0 0.0
    %81 = vmatpush1.msra.mxu0 0.0
    %82 = vmatprep.subr.mxu0 0.0
    %83 = vmatpush1.msra.mxu0 0.0
    %84 = vmatprep.subr.mxu0 0.0
    %85 = vmatpush1.msra.mxu0 0.0
    %86 = vmatprep.subr.mxu0 0.0
    %87 = vmatpush1.msra.mxu0 0.0
    %88 = vmatprep.subr.mxu0 0.0
    %89 = vmatpush1.msra.mxu0 0.0
    %90 = vmatprep.subr.mxu0 0.0
    %91 = vmatpush1.msra.mxu0 0.0
    %92 = vmatprep.subr.mxu0 0.0
    %93 = vmatpush1.msra.mxu0 0.0
    %94 = vmatprep.subr.mxu0 0.0
    %95 = vmatpush1.msra.mxu0 0.0
    %96 = vmatprep.subr.mxu0 0.0
    %97 = vmatpush1.msra.mxu0 0.0
    %98 = vmatprep.subr.mxu0 0.0
    %99 = vmatpush1.msra.mxu0 0.0
    %100 = vmatprep.mubr.f32.mxu0 0.0
    %101 = vmatmul.mubr.f32.gmra.mrb[0].mxu0 %v31
    %v102 = vpop.f32.mrb[0].mxu0
    %v103 = vadd.f32 0.0, %v102
    %v104 = vpop.f32.mrb[0].mxu0
    %105 = vmatprep.mubr.f32.mxu0 0.0
    %106 = vmatmul.mubr.f32.gmra.mrb[0].mxu0 %v34
    %v107 = vpop.f32.mrb[0].mxu0
    %v108 = vadd.f32 0.0, %v107
    %v109 = vpop.f32.mrb[0].mxu0
    %110 = vdwg.mxu0
    %v111 = vld [vmem:[%s3] sm:$0xff]
    %v112 = vld [vmem:[%s3 + $0x8] sm:$0xff]
    %v113 = vld [vmem:[%s3 + $0x10] sm:$0xff]
    %v114 = vld [vmem:[%s3 + $0x18] sm:$0xff]
    %v115 = vld [vmem:[%s3 + $0x20] sm:$0xff]
    %v116 = vld [vmem:[%s3 + $0x28] sm:$0xff]
    %v117 = vld [vmem:[%s3 + $0x30] sm:$0xff]
    %v118 = vld [vmem:[%s3 + $0x38] sm:$0xff]
    %vm119 = vcmask 523264
    %v121 = vsel %vm119, %v103, 0
    %v124 = vsel %vm119, %v108, 0
    %126 = vmatprep.subr.mxu0 0.0
    %127 = vmatpush1.msra.mxu0 %v111
    %128 = vmatprep.subr.mxu0 0.0
    %129 = vmatpush1.msra.mxu0 %v112
    %130 = vmatprep.subr.mxu0 0.0
    %131 = vmatpush1.msra.mxu0 %v113
    %132 = vmatprep.subr.mxu0 0.0
    %133 = vmatpush1.msra.mxu0 %v114
    %134 = vmatprep.subr.mxu0 0.0
    %135 = vmatpush1.msra.mxu0 %v115
    %136 = vmatprep.subr.mxu0 0.0
    %137 = vmatpush1.msra.mxu0 %v116
    %138 = vmatprep.subr.mxu0 0.0
    %139 = vmatpush1.msra.mxu0 %v117
    %140 = vmatprep.subr.mxu0 0.0
    %141 = vmatpush1.msra.mxu0 %v118
    %142 = vmatprep.subr.mxu0 0.0
    %143 = vmatpush1.msra.mxu0 0.0
    %144 = vmatprep.subr.mxu0 0.0
    %145 = vmatpush1.msra.mxu0 0.0
    %146 = vmatprep.subr.mxu0 0.0
    %147 = vmatpush1.msra.mxu0 0.0
    %148 = vmatprep.subr.mxu0 0.0
    %149 = vmatpush1.msra.mxu0 0.0
    %150 = vmatprep.subr.mxu0 0.0
    %151 = vmatpush1.msra.mxu0 0.0
    %152 = vmatprep.subr.mxu0 0.0
    %153 = vmatpush1.msra.mxu0 0.0
    %154 = vmatprep.subr.mxu0 0.0
    %155 = vmatpush1.msra.mxu0 0.0
    %156 = vmatprep.subr.mxu0 0.0
    %157 = vmatpush1.msra.mxu0 0.0
    %158 = vmatprep.subr.mxu0 0.0
    %159 = vmatpush1.msra.mxu0 0.0
    %160 = vmatprep.subr.mxu0 0.0
    %161 = vmatpush1.msra.mxu0 0.0
    %162 = vmatprep.subr.mxu0 0.0
    %163 = vmatpush1.msra.mxu0 0.0
    %164 = vmatprep.subr.mxu0 0.0
    %165 = vmatpush1.msra.mxu0 0.0
    %166 = vmatprep.subr.mxu0 0.0
    %167 = vmatpush1.msra.mxu0 0.0
    %168 = vmatprep.subr.mxu0 0.0
    %169 = vmatpush1.msra.mxu0 0.0
    %170 = vmatprep.subr.mxu0 0.0
    %171 = vmatpush1.msra.mxu0 0.0
    %172 = vmatprep.subr.mxu0 0.0
    %173 = vmatpush1.msra.mxu0 0.0
    %174 = vmatprep.subr.mxu0 0.0
    %175 = vmatpush1.msra.mxu0 0.0
    %176 = vmatprep.subr.mxu0 0.0
    %177 = vmatpush1.msra.mxu0 0.0
    %178 = vmatprep.subr.mxu0 0.0
    %179 = vmatpush1.msra.mxu0 0.0
    %180 = vmatprep.subr.mxu0 0.0
    %181 = vmatpush1.msra.mxu0 0.0
    %182 = vmatprep.subr.mxu0 0.0
    %183 = vmatpush1.msra.mxu0 0.0
    %184 = vmatprep.subr.mxu0 0.0
    %185 = vmatpush1.msra.mxu0 0.0
    %186 = vmatprep.subr.mxu0 0.0
    %187 = vmatpush1.msra.mxu0 0.0
    %188 = vmatprep.subr.mxu0 0.0
    %189 = vmatpush1.msra.mxu0 0.0
    %190 = vmatprep.mubr.f32.mxu0 0.0
    %191 = vmatmul.mubr.f32.gmra.mrb[0].mxu0 %v121
    %v192 = vpop.f32.mrb[0].mxu0
    %v193 = vadd.f32 0.0, %v192
    %v194 = vpop.f32.mrb[0].mxu0
    %195 = vmatprep.mubr.f32.mxu0 0.0
    %196 = vmatmul.mubr.f32.gmra.mrb[0].mxu0 %v124
    %v197 = vpop.f32.mrb[0].mxu0
    %v198 = vadd.f32 0.0, %v197
    %v199 = vpop.f32.mrb[0].mxu0
    %200 = vdwg.mxu0
    %203 = vrot.lane.b32.xlu0 %v193, 126
    %v204 = vpop.permute.xlu0 %203
    %205 = vrot.lane.b32.xlu0 %v198, 126
    %v206 = vpop.permute.xlu0 %205
    %209 = vxpose.xlu0.b32.start [1/16] %v204, 128
    %210 = vxpose.xlu0.b32.cont [2/16] %v206, 128
    %211 = vxpose.xlu0.b32.cont [3/16] 0.0, 128
    %212 = vxpose.xlu0.b32.cont [4/16] 0.0, 128
    %213 = vxpose.xlu0.b32.cont [5/16] 0.0, 128
    %214 = vxpose.xlu0.b32.cont [6/16] 0.0, 128
    %215 = vxpose.xlu0.b32.cont [7/16] 0.0, 128
    %216 = vxpose.xlu0.b32.cont [8/16] 0.0, 128
    %217 = vxpose.xlu0.b32.cont [9/16] 0.0, 128
    %218 = vxpose.xlu0.b32.cont [10/16] 0.0, 128
    %219 = vxpose.xlu0.b32.cont [11/16] 0.0, 128
    %220 = vxpose.xlu0.b32.cont [12/16] 0.0, 128
    %221 = vxpose.xlu0.b32.cont [13/16] 0.0, 128
    %222 = vxpose.xlu0.b32.cont [14/16] 0.0, 128
    %223 = vxpose.xlu0.b32.cont [15/16] 0.0, 128
    %224 = vxpose.xlu0.b32.end [16/16] 0.0, 128
    %v225 = vpop.trf.xlu0
    %v226 = vpop.trf.xlu0
    %v227 = vpop.trf.xlu0
    %v228 = vpop.trf.xlu0
    %v229 = vpop.trf.xlu0
    %v230 = vpop.trf.xlu0
    %v231 = vpop.trf.xlu0
    %v232 = vpop.trf.xlu0
    %v233 = vpop.trf.xlu0
    %v234 = vpop.trf.xlu0
    %v235 = vpop.trf.xlu0
    %v236 = vpop.trf.xlu0
    %v237 = vpop.trf.xlu0
    %v238 = vpop.trf.xlu0
    %v239 = vpop.trf.xlu0
    %v240 = vpop.trf.xlu0
    %v241 = vld [vmem:[%s1] sm:$0xff]
    %v242 = vld [vmem:[%s1 + $0x8] sm:$0xff]
    %s243 = sld [smem:[#allocation2]]
    %244 = vset.pattern.permute.xlu0 0
    %245 = vperm.xlu0 %244, %v193
    %v246 = vpop.permute.xlu0 %245
    %v248 = vlaneseq
    %v249 = vshrl.u32 %v248, 7
    %v250 = vsub.s32 0, %v249
    %v251 = vrot.slane %v225, %v250
    %v252 = vadd.f32 %v246, %v251
    %vm253 = vcmp.gt.f32.partialorder %v252, 0.0
    %v254 = vmul.f32 %v252, 0.2
    %v255 = vsel %vm253, %v252, %v254
    %v256 = vadd.f32 %v255, %v241
    %vm257 = vcmask 64512
    %v258 = vsel %vm257, %v256, -inf
    %259 = vmax.xlane.f32.xlu0 %v258
    %v260 = vpop.xlane.xlu0 %259
    %v261 = vsub.f32 %v256, %v260
    %v262 = vmul.f32 %v261, 1.442695
    %v263 = vpow.pop %v262
    %v264 = vsel %vm257, %v263, 0.0
    %265 = vadd.xlane.f32.xlu0 %v264
    %v266 = vpop.xlane.xlu0 %265
    %v267 = vrcp.pop %v266
    %v268 = vmul.f32 %v263, %v267
    %v270 = vsel %vm257, %v268, 0
    %272 = vmatprep.subr.mxu0 0.0
    %273 = vmatpush1.msra.mxu0 %v103
    %274 = vmatprep.subr.mxu0 0.0
    %275 = vmatpush1.msra.mxu0 0.0
    %276 = vmatprep.subr.mxu0 0.0
    %277 = vmatpush1.msra.mxu0 0.0
    %278 = vmatprep.subr.mxu0 0.0
    %279 = vmatpush1.msra.mxu0 0.0
    %280 = vmatprep.subr.mxu0 0.0
    %281 = vmatpush1.msra.mxu0 0.0
    %282 = vmatprep.subr.mxu0 0.0
    %283 = vmatpush1.msra.mxu0 0.0
    %284 = vmatprep.subr.mxu0 0.0
    %285 = vmatpush1.msra.mxu0 0.0
    %286 = vmatprep.subr.mxu0 0.0
    %287 = vmatpush1.msra.mxu0 0.0
    %288 = vmatprep.subr.mxu0 0.0
    %289 = vmatpush1.msra.mxu0 0.0
    %290 = vmatprep.subr.mxu0 0.0
    %291 = vmatpush1.msra.mxu0 0.0
    %292 = vmatprep.subr.mxu0 0.0
    %293 = vmatpush1.msra.mxu0 0.0
    %294 = vmatprep.subr.mxu0 0.0
    %295 = vmatpush1.msra.mxu0 0.0
    %296 = vmatprep.subr.mxu0 0.0
    %297 = vmatpush1.msra.mxu0 0.0
    %298 = vmatprep.subr.mxu0 0.0
    %299 = vmatpush1.msra.mxu0 0.0
    %300 = vmatprep.subr.mxu0 0.0
    %301 = vmatpush1.msra.mxu0 0.0
    %302 = vmatprep.subr.mxu0 0.0
    %303 = vmatpush1.msra.mxu0 0.0
    %304 = vmatprep.subr.mxu0 0.0
    %305 = vmatpush1.msra.mxu0 0.0
    %306 = vmatprep.subr.mxu0 0.0
    %307 = vmatpush1.msra.mxu0 0.0
    %308 = vmatprep.subr.mxu0 0.0
    %309 = vmatpush1.msra.mxu0 0.0
    %310 = vmatprep.subr.mxu0 0.0
    %311 = vmatpush1.msra.mxu0 0.0
    %312 = vmatprep.subr.mxu0 0.0
    %313 = vmatpush1.msra.mxu0 0.0
    %314 = vmatprep.subr.mxu0 0.0
    %315 = vmatpush1.msra.mxu0 0.0
    %316 = vmatprep.subr.mxu0 0.0
    %317 = vmatpush1.msra.mxu0 0.0
    %318 = vmatprep.subr.mxu0 0.0
    %319 = vmatpush1.msra.mxu0 0.0
    %320 = vmatprep.subr.mxu0 0.0
    %321 = vmatpush1.msra.mxu0 0.0
    %322 = vmatprep.subr.mxu0 0.0
    %323 = vmatpush1.msra.mxu0 0.0
    %324 = vmatprep.subr.mxu0 0.0
    %325 = vmatpush1.msra.mxu0 0.0
    %326 = vmatprep.subr.mxu0 0.0
    %327 = vmatpush1.msra.mxu0 0.0
    %328 = vmatprep.subr.mxu0 0.0
    %329 = vmatpush1.msra.mxu0 0.0
    %330 = vmatprep.subr.mxu0 0.0
    %331 = vmatpush1.msra.mxu0 0.0
    %332 = vmatprep.subr.mxu0 0.0
    %333 = vmatpush1.msra.mxu0 0.0
    %334 = vmatprep.subr.mxu0 0.0
    %335 = vmatpush1.msra.mxu0 0.0
    %336 = vmatprep.mubr.f32.mxu0 0.0
    %337 = vmatmul.mubr.f32.gmra.mrb[0].mxu0 %v270
    %v338 = vpop.f32.mrb[0].mxu0
    %v339 = vadd.f32 0.0, %v338
    %v340 = vpop.f32.mrb[0].mxu0
    %341 = vdwg.mxu0
    %vm342 = vcmp.gt.f32.partialorder %v339, 0.0
    %v343 = vmin.f32 %v339, 0.0
    %v344 = vmul.f32 %v343, 1.442695
    %v345 = vpow.pop %v344
    %v346 = vsub.f32 %v345, 1.0
    %v347 = vsel %vm342, %v339, %v346
    %348 = vset.pattern.permute.xlu0 1
    %349 = vperm.xlu0 %348, %v193
    %v350 = vpop.permute.xlu0 %349
    %v352 = vlaneseq
    %v353 = vshrl.u32 %v352, 7
    %v354 = vsub.s32 1, %v353
    %v355 = vrot.slane %v225, %v354
    %v356 = vadd.f32 %v350, %v355
    %vm357 = vcmp.gt.f32.partialorder %v356, 0.0
    %v358 = vmul.f32 %v356, 0.2
    %v359 = vsel %vm357, %v356, %v358
    %v360 = vadd.f32 %v359, %v241
    %v361 = vsel %vm257, %v360, -inf
    %362 = vmax.xlane.f32.xlu0 %v361
    %v363 = vpop.xlane.xlu0 %362
    %v364 = vsub.f32 %v360, %v363
    %v365 = vmul.f32 %v364, 1.442695
    %v366 = vpow.pop %v365
    %v367 = vsel %vm257, %v366, 0.0
    %368 = vadd.xlane.f32.xlu0 %v367
    %v369 = vpop.xlane.xlu0 %368
    %v370 = vrcp.pop %v369
    %v371 = vmul.f32 %v366, %v370
    %372 = vrot.lane.b32.xlu0 %v103, 96
    %v373 = vpop.permute.xlu0 %372
    %v376 = vsel %vm257, %v371, 0
    %378 = vmatprep.subr.mxu0 0.0
    %379 = vmatpush1.msra.mxu0 %v373
    %380 = vmatprep.subr.mxu0 0.0
    %381 = vmatpush1.msra.mxu0 0.0
    %382 = vmatprep.subr.mxu0 0.0
    %383 = vmatpush1.msra.mxu0 0.0
    %384 = vmatprep.subr.mxu0 0.0
    %385 = vmatpush1.msra.mxu0 0.0
    %386 = vmatprep.subr.mxu0 0.0
    %387 = vmatpush1.msra.mxu0 0.0
    %388 = vmatprep.subr.mxu0 0.0
    %389 = vmatpush1.msra.mxu0 0.0
    %390 = vmatprep.subr.mxu0 0.0
    %391 = vmatpush1.msra.mxu0 0.0
    %392 = vmatprep.subr.mxu0 0.0
    %393 = vmatpush1.msra.mxu0 0.0
    %394 = vmatprep.subr.mxu0 0.0
    %395 = vmatpush1.msra.mxu0 0.0
    %396 = vmatprep.subr.mxu0 0.0
    %397 = vmatpush1.msra.mxu0 0.0
    %398 = vmatprep.subr.mxu0 0.0
    %399 = vmatpush1.msra.mxu0 0.0
    %400 = vmatprep.subr.mxu0 0.0
    %401 = vmatpush1.msra.mxu0 0.0
    %402 = vmatprep.subr.mxu0 0.0
    %403 = vmatpush1.msra.mxu0 0.0
    %404 = vmatprep.subr.mxu0 0.0
    %405 = vmatpush1.msra.mxu0 0.0
    %406 = vmatprep.subr.mxu0 0.0
    %407 = vmatpush1.msra.mxu0 0.0
    %408 = vmatprep.subr.mxu0 0.0
    %409 = vmatpush1.msra.mxu0 0.0
    %410 = vmatprep.subr.mxu0 0.0
    %411 = vmatpush1.msra.mxu0 0.0
    %412 = vmatprep.subr.mxu0 0.0
    %413 = vmatpush1.msra.mxu0 0.0
    %414 = vmatprep.subr.mxu0 0.0
    %415 = vmatpush1.msra.mxu0 0.0
    %416 = vmatprep.subr.mxu0 0.0
    %417 = vmatpush1.msra.mxu0 0.0
    %418 = vmatprep.subr.mxu0 0.0
    %419 = vmatpush1.msra.mxu0 0.0
    %420 = vmatprep.subr.mxu0 0.0
    %421 = vmatpush1.msra.mxu0 0.0
    %422 = vmatprep.subr.mxu0 0.0
    %423 = vmatpush1.msra.mxu0 0.0
    %424 = vmatprep.subr.mxu0 0.0
    %425 = vmatpush1.msra.mxu0 0.0
    %426 = vmatprep.subr.mxu0 0.0
    %427 = vmatpush1.msra.mxu0 0.0
    %428 = vmatprep.subr.mxu0 0.0
    %429 = vmatpush1.msra.mxu0 0.0
    %430 = vmatprep.subr.mxu0 0.0
    %431 = vmatpush1.msra.mxu0 0.0
    %432 = vmatprep.subr.mxu0 0.0
    %433 = vmatpush1.msra.mxu0 0.0
    %434 = vmatprep.subr.mxu0 0.0
    %435 = vmatpush1.msra.mxu0 0.0
    %436 = vmatprep.subr.mxu0 0.0
    %437 = vmatpush1.msra.mxu0 0.0
    %438 = vmatprep.subr.mxu0 0.0
    %439 = vmatpush1.msra.mxu0 0.0
    %440 = vmatprep.subr.mxu0 0.0
    %441 = vmatpush1.msra.mxu0 0.0
    %442 = vmatprep.mubr.f32.mxu0 0.0
    %443 = vmatmul.mubr.f32.gmra.mrb[0].mxu0 %v376
    %v444 = vpop.f32.mrb[0].mxu0
    %v445 = vadd.f32 0.0, %v444
    %v446 = vpop.f32.mrb[0].mxu0
    %447 = vdwg.mxu0
    %vm448 = vcmp.gt.f32.partialorder %v445, 0.0
    %v449 = vmin.f32 %v445, 0.0
    %v450 = vmul.f32 %v449, 1.442695
    %v451 = vpow.pop %v450
    %v452 = vsub.f32 %v451, 1.0
    %v453 = vsel %vm448, %v445, %v452
    %458 = vrot.lane.b32.xlu0 %v115, 124
    %v459 = vpop.permute.xlu0 %458
    %460 = vrot.lane.b32.xlu0 %v116, 124
    %v461 = vpop.permute.xlu0 %460
    %462 = vrot.lane.b32.xlu0 %v117, 124
    %v463 = vpop.permute.xlu0 %462
    %464 = vrot.lane.b32.xlu0 %v118, 124
    %v465 = vpop.permute.xlu0 %464
    %vm470 = vcmask 261120
    %v472 = vsel %vm470, %v453, 0
    %474 = vmatprep.subr.mxu0 0.0
    %475 = vmatpush1.msra.mxu0 %v459
    %476 = vmatprep.subr.mxu0 0.0
    %477 = vmatpush1.msra.mxu0 %v461
    %478 = vmatprep.subr.mxu0 0.0
    %479 = vmatpush1.msra.mxu0 %v463
    %480 = vmatprep.subr.mxu0 0.0
    %481 = vmatpush1.msra.mxu0 %v465
    %482 = vmatprep.subr.mxu0 0.0
    %483 = vmatpush1.msra.mxu0 0.0
    %484 = vmatprep.subr.mxu0 0.0
    %485 = vmatpush1.msra.mxu0 0.0
    %486 = vmatprep.subr.mxu0 0.0
    %487 = vmatpush1.msra.mxu0 0.0
    %488 = vmatprep.subr.mxu0 0.0
    %489 = vmatpush1.msra.mxu0 0.0
    %490 = vmatprep.subr.mxu0 0.0
    %491 = vmatpush1.msra.mxu0 0.0
    %492 = vmatprep.subr.mxu0 0.0
    %493 = vmatpush1.msra.mxu0 0.0
    %494 = vmatprep.subr.mxu0 0.0
    %495 = vmatpush1.msra.mxu0 0.0
    %496 = vmatprep.subr.mxu0 0.0
    %497 = vmatpush1.msra.mxu0 0.0
    %498 = vmatprep.subr.mxu0 0.0
    %499 = vmatpush1.msra.mxu0 0.0
    %500 = vmatprep.subr.mxu0 0.0
    %501 = vmatpush1.msra.mxu0 0.0
    %502 = vmatprep.subr.mxu0 0.0
    %503 = vmatpush1.msra.mxu0 0.0
    %504 = vmatprep.subr.mxu0 0.0
    %505 = vmatpush1.msra.mxu0 0.0
    %506 = vmatprep.subr.mxu0 0.0
    %507 = vmatpush1.msra.mxu0 0.0
    %508 = vmatprep.subr.mxu0 0.0
    %509 = vmatpush1.msra.mxu0 0.0
    %510 = vmatprep.subr.mxu0 0.0
    %511 = vmatpush1.msra.mxu0 0.0
    %512 = vmatprep.subr.mxu0 0.0
    %513 = vmatpush1.msra.mxu0 0.0
    %514 = vmatprep.subr.mxu0 0.0
    %515 = vmatpush1.msra.mxu0 0.0
    %516 = vmatprep.subr.mxu0 0.0
    %517 = vmatpush1.msra.mxu0 0.0
    %518 = vmatprep.subr.mxu0 0.0
    %519 = vmatpush1.msra.mxu0 0.0
    %520 = vmatprep.subr.mxu0 0.0
    %521 = vmatpush1.msra.mxu0 0.0
    %522 = vmatprep.subr.mxu0 0.0
    %523 = vmatpush1.msra.mxu0 0.0
    %524 = vmatprep.subr.mxu0 0.0
    %525 = vmatpush1.msra.mxu0 0.0
    %526 = vmatprep.subr.mxu0 0.0
    %527 = vmatpush1.msra.mxu0 0.0
    %528 = vmatprep.subr.mxu0 0.0
    %529 = vmatpush1.msra.mxu0 0.0
    %530 = vmatprep.subr.mxu0 0.0
    %531 = vmatpush1.msra.mxu0 0.0
    %532 = vmatprep.subr.mxu0 0.0
    %533 = vmatpush1.msra.mxu0 0.0
    %534 = vmatprep.subr.mxu0 0.0
    %535 = vmatpush1.msra.mxu0 0.0
    %536 = vmatprep.subr.mxu0 0.0
    %537 = vmatpush1.msra.mxu0 0.0
    %538 = vmatprep.mubr.f32.mxu0 0.0
    %539 = vmatmul.mubr.f32.gmra.mrb[0].mxu0 %v472
    %v540 = vpop.f32.mrb[0].mxu0
    %v541 = vadd.f32 0.0, %v540
    %v542 = vpop.f32.mrb[0].mxu0
    %543 = vdwg.mxu0
    %548 = vrot.lane.b32.xlu0 %v111, 124
    %v549 = vpop.permute.xlu0 %548
    %550 = vrot.lane.b32.xlu0 %v112, 124
    %v551 = vpop.permute.xlu0 %550
    %552 = vrot.lane.b32.xlu0 %v113, 124
    %v553 = vpop.permute.xlu0 %552
    %554 = vrot.lane.b32.xlu0 %v114, 124
    %v555 = vpop.permute.xlu0 %554
    %v561 = vsel %vm470, %v347, 0
    %563 = vmatprep.subr.mxu0 0.0
    %564 = vmatpush1.msra.mxu0 %v549
    %565 = vmatprep.subr.mxu0 0.0
    %566 = vmatpush1.msra.mxu0 %v551
    %567 = vmatprep.subr.mxu0 0.0
    %568 = vmatpush1.msra.mxu0 %v553
    %569 = vmatprep.subr.mxu0 0.0
    %570 = vmatpush1.msra.mxu0 %v555
    %571 = vmatprep.subr.mxu0 0.0
    %572 = vmatpush1.msra.mxu0 0.0
    %573 = vmatprep.subr.mxu0 0.0
    %574 = vmatpush1.msra.mxu0 0.0
    %575 = vmatprep.subr.mxu0 0.0
    %576 = vmatpush1.msra.mxu0 0.0
    %577 = vmatprep.subr.mxu0 0.0
    %578 = vmatpush1.msra.mxu0 0.0
    %579 = vmatprep.subr.mxu0 0.0
    %580 = vmatpush1.msra.mxu0 0.0
    %581 = vmatprep.subr.mxu0 0.0
    %582 = vmatpush1.msra.mxu0 0.0
    %583 = vmatprep.subr.mxu0 0.0
    %584 = vmatpush1.msra.mxu0 0.0
    %585 = vmatprep.subr.mxu0 0.0
    %586 = vmatpush1.msra.mxu0 0.0
    %587 = vmatprep.subr.mxu0 0.0
    %588 = vmatpush1.msra.mxu0 0.0
    %589 = vmatprep.subr.mxu0 0.0
    %590 = vmatpush1.msra.mxu0 0.0
    %591 = vmatprep.subr.mxu0 0.0
    %592 = vmatpush1.msra.mxu0 0.0
    %593 = vmatprep.subr.mxu0 0.0
    %594 = vmatpush1.msra.mxu0 0.0
    %595 = vmatprep.subr.mxu0 0.0
    %596 = vmatpush1.msra.mxu0 0.0
    %597 = vmatprep.subr.mxu0 0.0
    %598 = vmatpush1.msra.mxu0 0.0
    %599 = vmatprep.subr.mxu0 0.0
    %600 = vmatpush1.msra.mxu0 0.0
    %601 = vmatprep.subr.mxu0 0.0
    %602 = vmatpush1.msra.mxu0 0.0
    %603 = vmatprep.subr.mxu0 0.0
    %604 = vmatpush1.msra.mxu0 0.0
    %605 = vmatprep.subr.mxu0 0.0
    %606 = vmatpush1.msra.mxu0 0.0
    %607 = vmatprep.subr.mxu0 0.0
    %608 = vmatpush1.msra.mxu0 0.0
    %609 = vmatprep.subr.mxu0 0.0
    %610 = vmatpush1.msra.mxu0 0.0
    %611 = vmatprep.subr.mxu0 0.0
    %612 = vmatpush1.msra.mxu0 0.0
    %613 = vmatprep.subr.mxu0 0.0
    %614 = vmatpush1.msra.mxu0 0.0
    %615 = vmatprep.subr.mxu0 0.0
    %616 = vmatpush1.msra.mxu0 0.0
    %617 = vmatprep.subr.mxu0 0.0
    %618 = vmatpush1.msra.mxu0 0.0
    %619 = vmatprep.subr.mxu0 0.0
    %620 = vmatpush1.msra.mxu0 0.0
    %621 = vmatprep.subr.mxu0 0.0
    %622 = vmatpush1.msra.mxu0 0.0
    %623 = vmatprep.subr.mxu0 0.0
    %624 = vmatpush1.msra.mxu0 0.0
    %625 = vmatprep.subr.mxu0 0.0
    %626 = vmatpush1.msra.mxu0 0.0
    %627 = vmatprep.mubr.f32.mxu0 0.0
    %628 = vmatmul.mubr.f32.gmra.mrb[0].mxu0 %v561
    %v629 = vpop.f32.mrb[0].mxu0
    %v630 = vadd.f32 %v541, %v629
    %v631 = vpop.f32.mrb[0].mxu0
    %632 = vdwg.mxu0
    %v633 = vstv %s243
    %v634 = vadd.f32 %v630, %v633
    %v635 = vtanh.pop %v634
    %636 = vset.pattern.permute.xlu0 0
    %637 = vperm.xlu0 %636, %v198
    %v638 = vpop.permute.xlu0 %637
    %v640 = vadd.f32 %v638, %v251
    %vm641 = vcmp.gt.f32.partialorder %v640, 0.0
    %v642 = vmul.f32 %v640, 0.2
    %v643 = vsel %vm641, %v640, %v642
    %645 = vrot.lane.b32.xlu0 %v242, 8
    %v646 = vpop.permute.xlu0 %645
    %v648 = vadd.f32 %v643, %v646
    %vm649 = vcmask 130112
    %v650 = vsel %vm649, %v648, -inf
    %651 = vmax.xlane.f32.xlu0 %v650
    %v652 = vpop.xlane.xlu0 %651
    %v653 = vsub.f32 %v648, %v652
    %v654 = vmul.f32 %v653, 1.442695
    %v655 = vpow.pop %v654
    %657 = vrot.lane.b32.xlu0 %v655, 120
    %v658 = vpop.permute.xlu0 %657
    %v660 = vsel %vm257, %v658, 0.0
    %661 = vadd.xlane.f32.xlu0 %v660
    %v662 = vpop.xlane.xlu0 %661
    %v663 = vrcp.pop %v662
    %v664 = vmul.f32 %v655, %v663
    %666 = vrot.lane.b32.xlu0 %v664, 120
    %v667 = vpop.permute.xlu0 %666
    %v668 = vsel %vm257, %v667, 0
    %670 = vmatprep.subr.mxu0 0.0
    %671 = vmatpush1.msra.mxu0 %v108
    %672 = vmatprep.subr.mxu0 0.0
    %673 = vmatpush1.msra.mxu0 0.0
    %674 = vmatprep.subr.mxu0 0.0
    %675 = vmatpush1.msra.mxu0 0.0
    %676 = vmatprep.subr.mxu0 0.0
    %677 = vmatpush1.msra.mxu0 0.0
    %678 = vmatprep.subr.mxu0 0.0
    %679 = vmatpush1.msra.mxu0 0.0
    %680 = vmatprep.subr.mxu0 0.0
    %681 = vmatpush1.msra.mxu0 0.0
    %682 = vmatprep.subr.mxu0 0.0
    %683 = vmatpush1.msra.mxu0 0.0
    %684 = vmatprep.subr.mxu0 0.0
    %685 = vmatpush1.msra.mxu0 0.0
    %686 = vmatprep.subr.mxu0 0.0
    %687 = vmatpush1.msra.mxu0 0.0
    %688 = vmatprep.subr.mxu0 0.0
    %689 = vmatpush1.msra.mxu0 0.0
    %690 = vmatprep.subr.mxu0 0.0
    %691 = vmatpush1.msra.mxu0 0.0
    %692 = vmatprep.subr.mxu0 0.0
    %693 = vmatpush1.msra.mxu0 0.0
    %694 = vmatprep.subr.mxu0 0.0
    %695 = vmatpush1.msra.mxu0 0.0
    %696 = vmatprep.subr.mxu0 0.0
    %697 = vmatpush1.msra.mxu0 0.0
    %698 = vmatprep.subr.mxu0 0.0
    %699 = vmatpush1.msra.mxu0 0.0
    %700 = vmatprep.subr.mxu0 0.0
    %701 = vmatpush1.msra.mxu0 0.0
    %702 = vmatprep.subr.mxu0 0.0
    %703 = vmatpush1.msra.mxu0 0.0
    %704 = vmatprep.subr.mxu0 0.0
    %705 = vmatpush1.msra.mxu0 0.0
    %706 = vmatprep.subr.mxu0 0.0
    %707 = vmatpush1.msra.mxu0 0.0
    %708 = vmatprep.subr.mxu0 0.0
    %709 = vmatpush1.msra.mxu0 0.0
    %710 = vmatprep.subr.mxu0 0.0
    %711 = vmatpush1.msra.mxu0 0.0
    %712 = vmatprep.subr.mxu0 0.0
    %713 = vmatpush1.msra.mxu0 0.0
    %714 = vmatprep.subr.mxu0 0.0
    %715 = vmatpush1.msra.mxu0 0.0
    %716 = vmatprep.subr.mxu0 0.0
    %717 = vmatpush1.msra.mxu0 0.0
    %718 = vmatprep.subr.mxu0 0.0
    %719 = vmatpush1.msra.mxu0 0.0
    %720 = vmatprep.subr.mxu0 0.0
    %721 = vmatpush1.msra.mxu0 0.0
    %722 = vmatprep.subr.mxu0 0.0
    %723 = vmatpush1.msra.mxu0 0.0
    %724 = vmatprep.subr.mxu0 0.0
    %725 = vmatpush1.msra.mxu0 0.0
    %726 = vmatprep.subr.mxu0 0.0
    %727 = vmatpush1.msra.mxu0 0.0
    %728 = vmatprep.subr.mxu0 0.0
    %729 = vmatpush1.msra.mxu0 0.0
    %730 = vmatprep.subr.mxu0 0.0
    %731 = vmatpush1.msra.mxu0 0.0
    %732 = vmatprep.subr.mxu0 0.0
    %733 = vmatpush1.msra.mxu0 0.0
    %734 = vmatprep.mubr.f32.mxu0 0.0
    %735 = vmatmul.mubr.f32.gmra.mrb[0].mxu0 %v668
    %v736 = vpop.f32.mrb[0].mxu0
    %v737 = vadd.f32 0.0, %v736
    %v738 = vpop.f32.mrb[0].mxu0
    %739 = vdwg.mxu0
    %vm740 = vcmp.gt.f32.partialorder %v737, 0.0
    %v741 = vmin.f32 %v737, 0.0
    %v742 = vmul.f32 %v741, 1.442695
    %v743 = vpow.pop %v742
    %v744 = vsub.f32 %v743, 1.0
    %v745 = vsel %vm740, %v737, %v744
    %746 = vset.pattern.permute.xlu0 1
    %747 = vperm.xlu0 %746, %v198
    %v748 = vpop.permute.xlu0 %747
    %v750 = vadd.f32 %v748, %v355
    %vm751 = vcmp.gt.f32.partialorder %v750, 0.0
    %v752 = vmul.f32 %v750, 0.2
    %v753 = vsel %vm751, %v750, %v752
    %v754 = vadd.f32 %v753, %v646
    %v755 = vsel %vm649, %v754, -inf
    %756 = vmax.xlane.f32.xlu0 %v755
    %v757 = vpop.xlane.xlu0 %756
    %v758 = vsub.f32 %v754, %v757
    %v759 = vmul.f32 %v758, 1.442695
    %v760 = vpow.pop %v759
    %762 = vrot.lane.b32.xlu0 %v760, 120
    %v763 = vpop.permute.xlu0 %762
    %v765 = vsel %vm257, %v763, 0.0
    %766 = vadd.xlane.f32.xlu0 %v765
    %v767 = vpop.xlane.xlu0 %766
    %v768 = vrcp.pop %v767
    %v769 = vmul.f32 %v760, %v768
    %771 = vrot.lane.b32.xlu0 %v769, 120
    %v772 = vpop.permute.xlu0 %771
    %773 = vrot.lane.b32.xlu0 %v108, 96
    %v774 = vpop.permute.xlu0 %773
    %v776 = vsel %vm257, %v772, 0
    %778 = vmatprep.subr.mxu0 0.0
    %779 = vmatpush1.msra.mxu0 %v774
    %780 = vmatprep.subr.mxu0 0.0
    %781 = vmatpush1.msra.mxu0 0.0
    %782 = vmatprep.subr.mxu0 0.0
    %783 = vmatpush1.msra.mxu0 0.0
    %784 = vmatprep.subr.mxu0 0.0
    %785 = vmatpush1.msra.mxu0 0.0
    %786 = vmatprep.subr.mxu0 0.0
    %787 = vmatpush1.msra.mxu0 0.0
    %788 = vmatprep.subr.mxu0 0.0
    %789 = vmatpush1.msra.mxu0 0.0
    %790 = vmatprep.subr.mxu0 0.0
    %791 = vmatpush1.msra.mxu0 0.0
    %792 = vmatprep.subr.mxu0 0.0
    %793 = vmatpush1.msra.mxu0 0.0
    %794 = vmatprep.subr.mxu0 0.0
    %795 = vmatpush1.msra.mxu0 0.0
    %796 = vmatprep.subr.mxu0 0.0
    %797 = vmatpush1.msra.mxu0 0.0
    %798 = vmatprep.subr.mxu0 0.0
    %799 = vmatpush1.msra.mxu0 0.0
    %800 = vmatprep.subr.mxu0 0.0
    %801 = vmatpush1.msra.mxu0 0.0
    %802 = vmatprep.subr.mxu0 0.0
    %803 = vmatpush1.msra.mxu0 0.0
    %804 = vmatprep.subr.mxu0 0.0
    %805 = vmatpush1.msra.mxu0 0.0
    %806 = vmatprep.subr.mxu0 0.0
    %807 = vmatpush1.msra.mxu0 0.0
    %808 = vmatprep.subr.mxu0 0.0
    %809 = vmatpush1.msra.mxu0 0.0
    %810 = vmatprep.subr.mxu0 0.0
    %811 = vmatpush1.msra.mxu0 0.0
    %812 = vmatprep.subr.mxu0 0.0
    %813 = vmatpush1.msra.mxu0 0.0
    %814 = vmatprep.subr.mxu0 0.0
    %815 = vmatpush1.msra.mxu0 0.0
    %816 = vmatprep.subr.mxu0 0.0
    %817 = vmatpush1.msra.mxu0 0.0
    %818 = vmatprep.subr.mxu0 0.0
    %819 = vmatpush1.msra.mxu0 0.0
    %820 = vmatprep.subr.mxu0 0.0
    %821 = vmatpush1.msra.mxu0 0.0
    %822 = vmatprep.subr.mxu0 0.0
    %823 = vmatpush1.msra.mxu0 0.0
    %824 = vmatprep.subr.mxu0 0.0
    %825 = vmatpush1.msra.mxu0 0.0
    %826 = vmatprep.subr.mxu0 0.0
    %827 = vmatpush1.msra.mxu0 0.0
    %828 = vmatprep.subr.mxu0 0.0
    %829 = vmatpush1.msra.mxu0 0.0
    %830 = vmatprep.subr.mxu0 0.0
    %831 = vmatpush1.msra.mxu0 0.0
    %832 = vmatprep.subr.mxu0 0.0
    %833 = vmatpush1.msra.mxu0 0.0
    %834 = vmatprep.subr.mxu0 0.0
    %835 = vmatpush1.msra.mxu0 0.0
    %836 = vmatprep.subr.mxu0 0.0
    %837 = vmatpush1.msra.mxu0 0.0
    %838 = vmatprep.subr.mxu0 0.0
    %839 = vmatpush1.msra.mxu0 0.0
    %840 = vmatprep.subr.mxu0 0.0
    %841 = vmatpush1.msra.mxu0 0.0
    %842 = vmatprep.mubr.f32.mxu0 0.0
    %843 = vmatmul.mubr.f32.gmra.mrb[0].mxu0 %v776
    %v844 = vpop.f32.mrb[0].mxu0
    %v845 = vadd.f32 0.0, %v844
    %v846 = vpop.f32.mrb[0].mxu0
    %847 = vdwg.mxu0
    %vm848 = vcmp.gt.f32.partialorder %v845, 0.0
    %v849 = vmin.f32 %v845, 0.0
    %v850 = vmul.f32 %v849, 1.442695
    %v851 = vpow.pop %v850
    %v852 = vsub.f32 %v851, 1.0
    %v853 = vsel %vm848, %v845, %v852
    %v855 = vsel %vm470, %v853, 0
    %857 = vmatprep.subr.mxu0 0.0
    %858 = vmatpush1.msra.mxu0 %v459
    %859 = vmatprep.subr.mxu0 0.0
    %860 = vmatpush1.msra.mxu0 %v461
    %861 = vmatprep.subr.mxu0 0.0
    %862 = vmatpush1.msra.mxu0 %v463
    %863 = vmatprep.subr.mxu0 0.0
    %864 = vmatpush1.msra.mxu0 %v465
    %865 = vmatprep.subr.mxu0 0.0
    %866 = vmatpush1.msra.mxu0 0.0
    %867 = vmatprep.subr.mxu0 0.0
    %868 = vmatpush1.msra.mxu0 0.0
    %869 = vmatprep.subr.mxu0 0.0
    %870 = vmatpush1.msra.mxu0 0.0
    %871 = vmatprep.subr.mxu0 0.0
    %872 = vmatpush1.msra.mxu0 0.0
    %873 = vmatprep.subr.mxu0 0.0
    %874 = vmatpush1.msra.mxu0 0.0
    %875 = vmatprep.subr.mxu0 0.0
    %876 = vmatpush1.msra.mxu0 0.0
    %877 = vmatprep.subr.mxu0 0.0
    %878 = vmatpush1.msra.mxu0 0.0
    %879 = vmatprep.subr.mxu0 0.0
    %880 = vmatpush1.msra.mxu0 0.0
    %881 = vmatprep.subr.mxu0 0.0
    %882 = vmatpush1.msra.mxu0 0.0
    %883 = vmatprep.subr.mxu0 0.0
    %884 = vmatpush1.msra.mxu0 0.0
    %885 = vmatprep.subr.mxu0 0.0
    %886 = vmatpush1.msra.mxu0 0.0
    %887 = vmatprep.subr.mxu0 0.0
    %888 = vmatpush1.msra.mxu0 0.0
    %889 = vmatprep.subr.mxu0 0.0
    %890 = vmatpush1.msra.mxu0 0.0
    %891 = vmatprep.subr.mxu0 0.0
    %892 = vmatpush1.msra.mxu0 0.0
    %893 = vmatprep.subr.mxu0 0.0
    %894 = vmatpush1.msra.mxu0 0.0
    %895 = vmatprep.subr.mxu0 0.0
    %896 = vmatpush1.msra.mxu0 0.0
    %897 = vmatprep.subr.mxu0 0.0
    %898 = vmatpush1.msra.mxu0 0.0
    %899 = vmatprep.subr.mxu0 0.0
    %900 = vmatpush1.msra.mxu0 0.0
    %901 = vmatprep.subr.mxu0 0.0
    %902 = vmatpush1.msra.mxu0 0.0
    %903 = vmatprep.subr.mxu0 0.0
    %904 = vmatpush1.msra.mxu0 0.0
    %905 = vmatprep.subr.mxu0 0.0
    %906 = vmatpush1.msra.mxu0 0.0
    %907 = vmatprep.subr.mxu0 0.0
    %908 = vmatpush1.msra.mxu0 0.0
    %909 = vmatprep.subr.mxu0 0.0
    %910 = vmatpush1.msra.mxu0 0.0
    %911 = vmatprep.subr.mxu0 0.0
    %912 = vmatpush1.msra.mxu0 0.0
    %913 = vmatprep.subr.mxu0 0.0
    %914 = vmatpush1.msra.mxu0 0.0
    %915 = vmatprep.subr.mxu0 0.0
    %916 = vmatpush1.msra.mxu0 0.0
    %917 = vmatprep.subr.mxu0 0.0
    %918 = vmatpush1.msra.mxu0 0.0
    %919 = vmatprep.subr.mxu0 0.0
    %920 = vmatpush1.msra.mxu0 0.0
    %921 = vmatprep.mubr.f32.mxu0 0.0
    %922 = vmatmul.mubr.f32.gmra.mrb[0].mxu0 %v855
    %v923 = vpop.f32.mrb[0].mxu0
    %v924 = vadd.f32 0.0, %v923
    %v925 = vpop.f32.mrb[0].mxu0
    %926 = vdwg.mxu0
    %v928 = vsel %vm470, %v745, 0
    %930 = vmatprep.subr.mxu0 0.0
    %931 = vmatpush1.msra.mxu0 %v549
    %932 = vmatprep.subr.mxu0 0.0
    %933 = vmatpush1.msra.mxu0 %v551
    %934 = vmatprep.subr.mxu0 0.0
    %935 = vmatpush1.msra.mxu0 %v553
    %936 = vmatprep.subr.mxu0 0.0
    %937 = vmatpush1.msra.mxu0 %v555
    %938 = vmatprep.subr.mxu0 0.0
    %939 = vmatpush1.msra.mxu0 0.0
    %940 = vmatprep.subr.mxu0 0.0
    %941 = vmatpush1.msra.mxu0 0.0
    %942 = vmatprep.subr.mxu0 0.0
    %943 = vmatpush1.msra.mxu0 0.0
    %944 = vmatprep.subr.mxu0 0.0
    %945 = vmatpush1.msra.mxu0 0.0
    %946 = vmatprep.subr.mxu0 0.0
    %947 = vmatpush1.msra.mxu0 0.0
    %948 = vmatprep.subr.mxu0 0.0
    %949 = vmatpush1.msra.mxu0 0.0
    %950 = vmatprep.subr.mxu0 0.0
    %951 = vmatpush1.msra.mxu0 0.0
    %952 = vmatprep.subr.mxu0 0.0
    %953 = vmatpush1.msra.mxu0 0.0
    %954 = vmatprep.subr.mxu0 0.0
    %955 = vmatpush1.msra.mxu0 0.0
    %956 = vmatprep.subr.mxu0 0.0
    %957 = vmatpush1.msra.mxu0 0.0
    %958 = vmatprep.subr.mxu0 0.0
    %959 = vmatpush1.msra.mxu0 0.0
    %960 = vmatprep.subr.mxu0 0.0
    %961 = vmatpush1.msra.mxu0 0.0
    %962 = vmatprep.subr.mxu0 0.0
    %963 = vmatpush1.msra.mxu0 0.0
    %964 = vmatprep.subr.mxu0 0.0
    %965 = vmatpush1.msra.mxu0 0.0
    %966 = vmatprep.subr.mxu0 0.0
    %967 = vmatpush1.msra.mxu0 0.0
    %968 = vmatprep.subr.mxu0 0.0
    %969 = vmatpush1.msra.mxu0 0.0
    %970 = vmatprep.subr.mxu0 0.0
    %971 = vmatpush1.msra.mxu0 0.0
    %972 = vmatprep.subr.mxu0 0.0
    %973 = vmatpush1.msra.mxu0 0.0
    %974 = vmatprep.subr.mxu0 0.0
    %975 = vmatpush1.msra.mxu0 0.0
    %976 = vmatprep.subr.mxu0 0.0
    %977 = vmatpush1.msra.mxu0 0.0
    %978 = vmatprep.subr.mxu0 0.0
    %979 = vmatpush1.msra.mxu0 0.0
    %980 = vmatprep.subr.mxu0 0.0
    %981 = vmatpush1.msra.mxu0 0.0
    %982 = vmatprep.subr.mxu0 0.0
    %983 = vmatpush1.msra.mxu0 0.0
    %984 = vmatprep.subr.mxu0 0.0
    %985 = vmatpush1.msra.mxu0 0.0
    %986 = vmatprep.subr.mxu0 0.0
    %987 = vmatpush1.msra.mxu0 0.0
    %988 = vmatprep.subr.mxu0 0.0
    %989 = vmatpush1.msra.mxu0 0.0
    %990 = vmatprep.subr.mxu0 0.0
    %991 = vmatpush1.msra.mxu0 0.0
    %992 = vmatprep.subr.mxu0 0.0
    %993 = vmatpush1.msra.mxu0 0.0
    %994 = vmatprep.mubr.f32.mxu0 0.0
    %995 = vmatmul.mubr.f32.gmra.mrb[0].mxu0 %v928
    %v996 = vpop.f32.mrb[0].mxu0
    %v997 = vadd.f32 %v924, %v996
    %v998 = vpop.f32.mrb[0].mxu0
    %999 = vdwg.mxu0
    %v1000 = vadd.f32 %v997, %v633
    %v1001 = vtanh.pop %v1000
    %1003 = vrot.lane.b32.xlu0 %v1001, 1
    %v1004 = vpop.permute.xlu0 %1003
    %vm1006 = vcmask 7168
    %v1007 = vsel %vm1006, %v635, %v1004
    %1008 = vxpose.xlu0.b32.start [1/16] %v1007, 128
    %1009 = vxpose.xlu0.b32.cont [2/16] 0.0, 128
    %1010 = vxpose.xlu0.b32.cont [3/16] 0.0, 128
    %1011 = vxpose.xlu0.b32.cont [4/16] 0.0, 128
    %1012 = vxpose.xlu0.b32.cont [5/16] 0.0, 128
    %1013 = vxpose.xlu0.b32.cont [6/16] 0.0, 128
    %1014 = vxpose.xlu0.b32.cont [7/16] 0.0, 128
    %1015 = vxpose.xlu0.b32.cont [8/16] 0.0, 128
    %1016 = vxpose.xlu0.b32.cont [9/16] 0.0, 128
    %1017 = vxpose.xlu0.b32.cont [10/16] 0.0, 128
    %1018 = vxpose.xlu0.b32.cont [11/16] 0.0, 128
    %1019 = vxpose.xlu0.b32.cont [12/16] 0.0, 128
    %1020 = vxpose.xlu0.b32.cont [13/16] 0.0, 128
    %1021 = vxpose.xlu0.b32.cont [14/16] 0.0, 128
    %1022 = vxpose.xlu0.b32.cont [15/16] 0.0, 128
    %1023 = vxpose.xlu0.b32.end [16/16] 0.0, 128
    %v1024 = vpop.trf.xlu0
    %v1025 = vpop.trf.xlu0
    %v1026 = vpop.trf.xlu0
    %v1027 = vpop.trf.xlu0
    %v1028 = vpop.trf.xlu0
    %v1029 = vpop.trf.xlu0
    %v1030 = vpop.trf.xlu0
    %v1031 = vpop.trf.xlu0
    %v1032 = vpop.trf.xlu0
    %v1033 = vpop.trf.xlu0
    %v1034 = vpop.trf.xlu0
    %v1035 = vpop.trf.xlu0
    %v1036 = vpop.trf.xlu0
    %v1037 = vpop.trf.xlu0
    %v1038 = vpop.trf.xlu0
    %v1039 = vpop.trf.xlu0
    %v1040 = vld [vmem:[%s4] sm:$0xff]
    %v1041 = vld [vmem:[%s4 + $0x8] sm:$0x1]
    %v1042 = vlaneseq
    %v1043 = vshrl.u32 %v1042, 7
    %v1044 = vsub.s32 0, %v1043
    %v1045 = vrot.slane %v1041, %v1044
    %v1047 = vsel %vm257, %v1024, 0
    %1049 = vmatprep.subr.mxu0 0.0
    %1050 = vmatpush1.msra.mxu0 %v1040
    %1051 = vmatprep.subr.mxu0 0.0
    %1052 = vmatpush1.msra.mxu0 0.0
    %1053 = vmatprep.subr.mxu0 0.0
    %1054 = vmatpush1.msra.mxu0 0.0
    %1055 = vmatprep.subr.mxu0 0.0
    %1056 = vmatpush1.msra.mxu0 0.0
    %1057 = vmatprep.subr.mxu0 0.0
    %1058 = vmatpush1.msra.mxu0 0.0
    %1059 = vmatprep.subr.mxu0 0.0
    %1060 = vmatpush1.msra.mxu0 0.0
    %1061 = vmatprep.subr.mxu0 0.0
    %1062 = vmatpush1.msra.mxu0 0.0
    %1063 = vmatprep.subr.mxu0 0.0
    %1064 = vmatpush1.msra.mxu0 0.0
    %1065 = vmatprep.subr.mxu0 0.0
    %1066 = vmatpush1.msra.mxu0 0.0
    %1067 = vmatprep.subr.mxu0 0.0
    %1068 = vmatpush1.msra.mxu0 0.0
    %1069 = vmatprep.subr.mxu0 0.0
    %1070 = vmatpush1.msra.mxu0 0.0
    %1071 = vmatprep.subr.mxu0 0.0
    %1072 = vmatpush1.msra.mxu0 0.0
    %1073 = vmatprep.subr.mxu0 0.0
    %1074 = vmatpush1.msra.mxu0 0.0
    %1075 = vmatprep.subr.mxu0 0.0
    %1076 = vmatpush1.msra.mxu0 0.0
    %1077 = vmatprep.subr.mxu0 0.0
    %1078 = vmatpush1.msra.mxu0 0.0
    %1079 = vmatprep.subr.mxu0 0.0
    %1080 = vmatpush1.msra.mxu0 0.0
    %1081 = vmatprep.subr.mxu0 0.0
    %1082 = vmatpush1.msra.mxu0 0.0
    %1083 = vmatprep.subr.mxu0 0.0
    %1084 = vmatpush1.msra.mxu0 0.0
    %1085 = vmatprep.subr.mxu0 0.0
    %1086 = vmatpush1.msra.mxu0 0.0
    %1087 = vmatprep.subr.mxu0 0.0
    %1088 = vmatpush1.msra.mxu0 0.0
    %1089 = vmatprep.subr.mxu0 0.0
    %1090 = vmatpush1.msra.mxu0 0.0
    %1091 = vmatprep.subr.mxu0 0.0
    %1092 = vmatpush1.msra.mxu0 0.0
    %1093 = vmatprep.subr.mxu0 0.0
    %1094 = vmatpush1.msra.mxu0 0.0
    %1095 = vmatprep.subr.mxu0 0.0
    %1096 = vmatpush1.msra.mxu0 0.0
    %1097 = vmatprep.subr.mxu0 0.0
    %1098 = vmatpush1.msra.mxu0 0.0
    %1099 = vmatprep.subr.mxu0 0.0
    %1100 = vmatpush1.msra.mxu0 0.0
    %1101 = vmatprep.subr.mxu0 0.0
    %1102 = vmatpush1.msra.mxu0 0.0
    %1103 = vmatprep.subr.mxu0 0.0
    %1104 = vmatpush1.msra.mxu0 0.0
    %1105 = vmatprep.subr.mxu0 0.0
    %1106 = vmatpush1.msra.mxu0 0.0
    %1107 = vmatprep.subr.mxu0 0.0
    %1108 = vmatpush1.msra.mxu0 0.0
    %1109 = vmatprep.subr.mxu0 0.0
    %1110 = vmatpush1.msra.mxu0 0.0
    %1111 = vmatprep.subr.mxu0 0.0
    %1112 = vmatpush1.msra.mxu0 0.0
    %1113 = vmatprep.mubr.f32.mxu0 0.0
    %1114 = vmatmul.mubr.f32.gmra.mrb[0].mxu0 %v1047
    %v1115 = vpop.f32.mrb[0].mxu0
    %v1116 = vadd.f32 %v1045, %v1115
    %v1117 = vpop.f32.mrb[0].mxu0
    %1118 = vdwg.mxu0
    %v1119 = vxor.u32 %v1116, 2147483648
    %v1120 = vmul.f32 %v1119, 1.442695
    %v1121 = vpow.pop %v1120
    %v1122 = vadd.f32 %v1121, 1.0
    %v1123 = vrcp.pop %v1122
    %v1124 = vmul.f32 1.0, %v1123
    %vm1125 = vcmask 25600
    %1126 = vst.msk [vmem:[#allocation3] sm:$0x3] %vm1125, %v1124
    // Predicated region
    $region26: #{tpu_custom_call.1} parent=1 // pred_check
      _
    $region27: #{tpu_custom_call.1} parent=1 // pred_check_branch
      %1128 = sbr.rel (0) target = $region29
    $region28: #{tpu_custom_call.1} parent=1 // pred_region
      %s1130 = ssub.s32 32, 32
      %1131 = vsyncadd [#allocation4], %s1130
      %s1133 = sshll.u32 [#allocation3], 4
      %s1134 = int_to_ptr.vmem [resolvable:$true] %s1133
      %1136 = dma.vmem_to_hbm [thread:$0]  %s1134, 32, %s6, [#allocation4]
    $region29: #{tpu_custom_call.1} parent=1 // pred_fallthru
      _
    // Predicated region
    $region30: #{tpu_custom_call.1} parent=1 // pred_check
      _
    $region31: #{tpu_custom_call.1} parent=1 // pred_check_branch
      %1138 = sbr.rel (0) target = $region33
    $region32: #{tpu_custom_call.1} parent=1 // pred_region
      %1139 = dma.done [#allocation4], 32
    $region33: #{tpu_custom_call.1} parent=1 // pred_fallthru
      _
    %1140 = vsyncpa [#allocation4], 1

</llo_original>
